<compile_context>
chip_gen: v7x
topology: tpu7x:2x2x1
jax: 0.10.0
libtpu: 0.0.40
codegen_flags: <defaults>
</compile_context>

<pallas_src>
import jax
import jax.numpy as jnp
from jax.experimental import pallas as pl
from jax.experimental.pallas import tpu as pltpu

d = 3  # output features
m = 3  # input features

_SUB = 8          # sublane granularity for the batch (second-to-last) dim
_TM_MAX = 1024    # max rows per grid step (amortizes ~0.35 us/step overhead)


def _linear_kernel(x_ref, w_ref, b_ref, o_ref):
    # x_ref: (TM, m), w_ref: (m, d), b_ref: (1, d), o_ref: (TM, d)
    acc = jnp.dot(x_ref[...], w_ref[...], preferred_element_type=jnp.float32)
    o_ref[...] = acc + b_ref[...]


def h_latent_space_forward(x, weight, bias):
    """x: (B, m); weight: (d, m) [nn.Linear layout]; bias: (d,). Returns (B, d) f32."""
    B = x.shape[0]

    x_f = x.astype(jnp.float32)
    w_t = weight.astype(jnp.float32).T            # (m, d) so kernel does x @ W + b
    b_2 = bias.astype(jnp.float32).reshape(1, d)  # (1, d)

    # Pick a batch tile: whole (8-rounded) batch if it is small, else fixed TM.
    if B <= _TM_MAX:
        tm = max(_SUB, ((B + _SUB - 1) // _SUB) * _SUB)
        B_pad = tm
    else:
        tm = _TM_MAX
        B_pad = ((B + tm - 1) // tm) * tm

    if B_pad != B:
        x_f = jnp.pad(x_f, ((0, B_pad - B), (0, 0)))

    grid = (B_pad // tm,)

    out = pl.pallas_call(
        _linear_kernel,
        out_shape=jax.ShapeDtypeStruct((B_pad, d), jnp.float32),
        grid_spec=pl.GridSpec(
            grid=grid,
            in_specs=[
                pl.BlockSpec((tm, m), lambda i: (i, 0)),   # x tile per step
                pl.BlockSpec((m, d), lambda i: (0, 0)),    # weight, resident
                pl.BlockSpec((1, d), lambda i: (0, 0)),    # bias, resident
            ],
            out_specs=pl.BlockSpec((tm, d), lambda i: (i, 0)),
        ),
        compiler_params=pltpu.CompilerParams(
            dimension_semantics=("parallel",),
        ),
    )(x_f, w_t, b_2)

    return out[:B, :]


if __name__ == "__main__":
    key = jax.random.PRNGKey(0)
    k_w, k_b, k_x1, k_x2 = jax.random.split(key, 4)

    # Deterministic synthetic parameters (shapes from nn.Linear(m, d)).
    weight = jax.random.normal(k_w, (d, m), dtype=jnp.float32)
    bias = jax.random.normal(k_b, (d,), dtype=jnp.float32)

    # Small batch (single tile path).
    B1 = 8
    x1 = jax.random.normal(k_x1, (B1, m), dtype=jnp.float32)
    y1 = jax.block_until_ready(h_latent_space_forward(x1, weight, bias))
    y1_ref = x1 @ weight.T + bias
    assert y1.shape == (B1, d)
    assert jnp.allclose(y1, y1_ref, atol=1e-5, rtol=1e-5)

    # Ragged batch (exercises 8-row padding path).
    B2 = 13
    x2 = jax.random.normal(k_x2, (B2, m), dtype=jnp.float32)
    y2 = jax.block_until_ready(h_latent_space_forward(x2, weight, bias))
    y2_ref = x2 @ weight.T + bias
    assert y2.shape == (B2, d)
    assert jnp.allclose(y2, y2_ref, atol=1e-5, rtol=1e-5)

    print("KERNEL_OK")
</pallas_src>

<mosaic_0001>
module attributes {stable_mosaic.version = 11 : i64} {
  func.func @_linear_kernel(%arg0: i32, %arg1: memref<8x3xf32, #tpu.memory_space<vmem>>, %arg2: memref<3x3xf32, #tpu.memory_space<vmem>>, %arg3: memref<1x3xf32, #tpu.memory_space<vmem>>, %arg4: memref<8x3xf32, #tpu.memory_space<vmem>>) attributes {dimension_semantics = [#tpu.dimension_semantics<parallel>], iteration_bounds = array<i64: 1>, scalar_prefetch = 0 : i64, scratch_operands = 0 : i64, tpu.core_type = #tpu.core_type<tc>, window_params = [{transform_indices = @transform_0, window_bounds = array<i64: 8, 3>}, {pipeline_mode = #tpu.pipeline_mode<synchronous>, transform_indices = @transform_1, window_bounds = array<i64: 3, 3>}, {pipeline_mode = #tpu.pipeline_mode<synchronous>, transform_indices = @transform_2, window_bounds = array<i64: 1, 3>}, {transform_indices = @transform_3, window_bounds = array<i64: 8, 3>}]} {
    %c0 = arith.constant 0 : index
    %c0_0 = arith.constant 0 : index
    %0 = vector.load %arg1[%c0, %c0_0] : memref<8x3xf32, #tpu.memory_space<vmem>>, vector<8x3xf32>
    %c0_1 = arith.constant 0 : index
    %c0_2 = arith.constant 0 : index
    %1 = vector.load %arg2[%c0_1, %c0_2] : memref<3x3xf32, #tpu.memory_space<vmem>>, vector<3x3xf32>
    %cst = arith.constant dense<0.000000e+00> : vector<8x3xf32>
    %2 = tpu.matmul %0, %1, %cst {dimension_numbers = #tpu.dot_dimension_numbers<[1], [0], [0], [1], [0, 0, 1, 1], [], []>} : vector<8x3xf32>, vector<3x3xf32>, vector<8x3xf32> -> vector<8x3xf32>
    %c0_3 = arith.constant 0 : index
    %c0_4 = arith.constant 0 : index
    %3 = vector.load %arg3[%c0_3, %c0_4] : memref<1x3xf32, #tpu.memory_space<vmem>>, vector<1x3xf32>
    %4 = vector.broadcast %3 : vector<1x3xf32> to vector<8x3xf32>
    %5 = arith.addf %2, %4 : vector<8x3xf32>
    %c0_5 = arith.constant 0 : index
    %c0_6 = arith.constant 0 : index
    %6 = vector.load %arg4[%c0_5, %c0_6] : memref<8x3xf32, #tpu.memory_space<vmem>>, vector<8x3xf32>
    tpu.vector_store %arg4[%c0_5, %c0_6], %5 {strides = array<i32>} : memref<8x3xf32, #tpu.memory_space<vmem>>, vector<8x3xf32>,
    return
  }
  func.func @transform_0(%arg0: i32) -> (i32, i32) {
    %c0_i32 = arith.constant 0 : i32
    %c0_i32_0 = arith.constant 0 : i32
    return %arg0, %c0_i32 : i32, i32
  }
  func.func @transform_1(%arg0: i32) -> (i32, i32) {
    %c0_i32 = arith.constant 0 : i32
    %c0_i32_0 = arith.constant 0 : i32
    %c0_i32_1 = arith.constant 0 : i32
    return %c0_i32, %c0_i32_0 : i32, i32
  }
  func.func @transform_2(%arg0: i32) -> (i32, i32) {
    %c0_i32 = arith.constant 0 : i32
    %c0_i32_0 = arith.constant 0 : i32
    %c0_i32_1 = arith.constant 0 : i32
    return %c0_i32, %c0_i32_0 : i32, i32
  }
  func.func @transform_3(%arg0: i32) -> (i32, i32) {
    %c0_i32 = arith.constant 0 : i32
    %c0_i32_0 = arith.constant 0 : i32
    return %arg0, %c0_i32 : i32, i32
  }
}

</mosaic_0001>

<llo_original>
// kernel: tpu_custom_call.1
$region0: #{tpu_custom_call.1}
  #allocation0 [shape = 'u32[]', space=smem, size = 0x4, offset = 0x4, fixed_abs, tag = 'smem constant byte address 0x4 - core index']
  #allocation1 [shape = 'u32[144,128]{1,0:T(1,128)}', space=vmem, size = 0x12000, scoped, tag = 'internal scratch']
  %s0 = inlined_call_operand.vmem [shape: f32[8,3], index: 0, kind: input, shape index: {}]
  %s1 = inlined_call_operand.vmem [shape: f32[3,3], index: 1, kind: input, shape index: {}]
  %s2 = inlined_call_operand.vmem [shape: f32[1,3], index: 2, kind: input, shape index: {}]
  %s3 = inlined_call_operand.vmem [shape: f32[8,3], index: 3, kind: output, shape index: {}]
  %s4 = sld [smem:[#allocation0]]
  $region22: #{tpu_custom_call.1} parent=0
    _
  %s6 = ssub.s32 1, %s4
  %s7 = scalar_select 0, %s6, %s4
  // Predicated region
  $region2: #{tpu_custom_call.1} parent=0 // pred_check
    _
  $region3: #{tpu_custom_call.1} parent=0 // pred_check_branch
    %9 = sbr.rel (0) target = $region5
  $region4: #{tpu_custom_call.1} parent=0 // pred_region
    _
  $region5: #{tpu_custom_call.1} parent=0 // pred_fallthru
    _
  // Predicated region
  $region6: #{tpu_custom_call.1} parent=0 // pred_check
    _
  $region7: #{tpu_custom_call.1} parent=0 // pred_check_branch
    %11 = sbr.rel (0) target = $region9
  $region8: #{tpu_custom_call.1} parent=0 // pred_region
    _
  $region9: #{tpu_custom_call.1} parent=0 // pred_fallthru
    _
  // Predicated region
  $region10: #{tpu_custom_call.1} parent=0 // pred_check
    _
  $region11: #{tpu_custom_call.1} parent=0 // pred_check_branch
    %13 = sbr.rel (0) target = $region13
  $region12: #{tpu_custom_call.1} parent=0 // pred_region
    _
  $region13: #{tpu_custom_call.1} parent=0 // pred_fallthru
    _
  %v14 = vld [vmem:[%s0] sm:$0xff]
  %v15 = vld [vmem:[%s1] sm:$0x7]
  %v16 = vld [vmem:[%s2] sm:$0x1]
  %v18 = vlaneseq
  %v19 = vshrl.u32 %v18, 7
  %v20 = vsub.s32 0, %v19
  %v21 = vrot.slane %v16, %v20
  %vm23 = vcmask 23552
  %v25 = vsel %vm23, %v14, 0
  %vm27 = vcmask 1042432
  %v29 = vsel %vm27, %v15, 0
  %31 = vmatprep.subr.mxu0 0.0
  %32 = vmatpush1.msra.mxu0 %v29
  %33 = vmatprep.subr.mxu0 0.0
  %34 = vmatpush1.msra.mxu0 0.0
  %35 = vmatprep.subr.mxu0 0.0
  %36 = vmatpush1.msra.mxu0 0.0
  %37 = vmatprep.subr.mxu0 0.0
  %38 = vmatpush1.msra.mxu0 0.0
  %39 = vmatprep.subr.mxu0 0.0
  %40 = vmatpush1.msra.mxu0 0.0
  %41 = vmatprep.subr.mxu0 0.0
  %42 = vmatpush1.msra.mxu0 0.0
  %43 = vmatprep.subr.mxu0 0.0
  %44 = vmatpush1.msra.mxu0 0.0
  %45 = vmatprep.subr.mxu0 0.0
  %46 = vmatpush1.msra.mxu0 0.0
  %47 = vmatprep.subr.mxu0 0.0
  %48 = vmatpush1.msra.mxu0 0.0
  %49 = vmatprep.subr.mxu0 0.0
  %50 = vmatpush1.msra.mxu0 0.0
  %51 = vmatprep.subr.mxu0 0.0
  %52 = vmatpush1.msra.mxu0 0.0
  %53 = vmatprep.subr.mxu0 0.0
  %54 = vmatpush1.msra.mxu0 0.0
  %55 = vmatprep.subr.mxu0 0.0
  %56 = vmatpush1.msra.mxu0 0.0
  %57 = vmatprep.subr.mxu0 0.0
  %58 = vmatpush1.msra.mxu0 0.0
  %59 = vmatprep.subr.mxu0 0.0
  %60 = vmatpush1.msra.mxu0 0.0
  %61 = vmatprep.subr.mxu0 0.0
  %62 = vmatpush1.msra.mxu0 0.0
  %63 = vmatprep.subr.mxu0 0.0
  %64 = vmatpush1.msra.mxu0 0.0
  %65 = vmatprep.subr.mxu0 0.0
  %66 = vmatpush1.msra.mxu0 0.0
  %67 = vmatprep.subr.mxu0 0.0
  %68 = vmatpush1.msra.mxu0 0.0
  %69 = vmatprep.subr.mxu0 0.0
  %70 = vmatpush1.msra.mxu0 0.0
  %71 = vmatprep.subr.mxu0 0.0
  %72 = vmatpush1.msra.mxu0 0.0
  %73 = vmatprep.subr.mxu0 0.0
  %74 = vmatpush1.msra.mxu0 0.0
  %75 = vmatprep.subr.mxu0 0.0
  %76 = vmatpush1.msra.mxu0 0.0
  %77 = vmatprep.subr.mxu0 0.0
  %78 = vmatpush1.msra.mxu0 0.0
  %79 = vmatprep.subr.mxu0 0.0
  %80 = vmatpush1.msra.mxu0 0.0
  %81 = vmatprep.subr.mxu0 0.0
  %82 = vmatpush1.msra.mxu0 0.0
  %83 = vmatprep.subr.mxu0 0.0
  %84 = vmatpush1.msra.mxu0 0.0
  %85 = vmatprep.subr.mxu0 0.0
  %86 = vmatpush1.msra.mxu0 0.0
  %87 = vmatprep.subr.mxu0 0.0
  %88 = vmatpush1.msra.mxu0 0.0
  %89 = vmatprep.subr.mxu0 0.0
  %90 = vmatpush1.msra.mxu0 0.0
  %91 = vmatprep.subr.mxu0 0.0
  %92 = vmatpush1.msra.mxu0 0.0
  %93 = vmatprep.subr.mxu0 0.0
  %94 = vmatpush1.msra.mxu0 0.0
  %95 = vmatprep.mubr.f32.mxu0 0.0
  %96 = vmatmul.mubr.f32.gmra.mrb[0].mxu0 %v25
  %v97 = vpop.f32.mrb[0].mxu0
  %v98 = vadd.f32 %v21, %v97
  %v99 = vpop.f32.mrb[0].mxu0
  %100 = vdwg.mxu0
  %101 = vst.msk [vmem:[%s3] sm:$0xff] %vm23, %v98
  // Predicated region
  $region14: #{tpu_custom_call.1} parent=0 // pred_check
    _
  $region15: #{tpu_custom_call.1} parent=0 // pred_check_branch
    %103 = sbr.rel (0) target = $region17
  $region16: #{tpu_custom_call.1} parent=0 // pred_region
    _
  $region17: #{tpu_custom_call.1} parent=0 // pred_fallthru
    _
  // Predicated region
  $region18: #{tpu_custom_call.1} parent=0 // pred_check
    _
  $region19: #{tpu_custom_call.1} parent=0 // pred_check_branch
    %105 = sbr.rel (0) target = $region21
  $region20: #{tpu_custom_call.1} parent=0 // pred_region
    _
  $region21: #{tpu_custom_call.1} parent=0 // pred_fallthru
    _

</llo_original>
